<compile_context>
chip_gen: v7x
topology: tpu7x:2x2x1
jax: 0.10.0
libtpu: 0.0.40
codegen_flags: <defaults>
</compile_context>

<pallas_src>
import jax
import jax.numpy as jnp
from jax.experimental import pallas as pl
from jax.experimental.pallas import tpu as pltpu


def kb_bias_kernel(keys_ref, out_ref):
    """keys_ref: [tile_b, 1] int32 (VMEM); out_ref: [tile_b, num_rels] (VMEM)."""
    col = jax.lax.broadcasted_iota(jnp.int32, out_ref.shape, 1)
    # One vectorized compare + one full-tile store per grid step.
    out_ref[...] = (col == keys_ref[...]).astype(out_ref.dtype)


def _pick_tile(B: int) -> int:
    """Batch tile: big enough to amortize per-step overhead, small enough for
    v5e's 16 MiB default scoped VMEM and to keep >=2 grid steps at large B."""
    b8 = max(8, pl.cdiv(B, 8) * 8)
    tile = min(4096, max(1024, pl.cdiv(B, 4)))   # aim ~4 steps, >=1024 rows
    tile = min(tile, b8)                          # never exceed padded batch
    return pl.cdiv(tile, 8) * 8                   # 8-aligned sublane tile


def kb_bias_forward(labels, kb_flat, num_obj: int, num_rels: int, *,
                    out_dtype=jnp.float32, pallas_min_batch: int = 1024,
                    tile_b: int | None = None):
    """labels: [B, 2] int, kb_flat: [num_obj*num_obj] int32 -> [B, num_rels]."""
    B = labels.shape[0]
    labels = labels.astype(jnp.int32)
    # NOTE: clamps out-of-range labels to valid indices (PyTorch would index-error).
    labels = jnp.clip(labels, 0, num_obj - 1)

    # KB lookup outside the kernel (tiny gather; kernel stays pure compare+store).
    keys = kb_flat[labels[:, 0] * num_obj + labels[:, 1]].astype(jnp.int32)  # [B]

    # Small-batch fast path: launch overhead would dominate; let XLA fuse it.
    if B < pallas_min_batch:
        return jax.nn.one_hot(keys, num_rels, dtype=out_dtype)

    tile = _pick_tile(B) if tile_b is None else max(8, pl.cdiv(tile_b, 8) * 8)
    b_pad = pl.cdiv(B, tile) * tile

    # Pad rows get key = -1 -> all-zero row (sliced away below anyway).
    keys_pad = jnp.pad(keys, (0, b_pad - B), constant_values=-1)[:, None]

    out_padded = pl.pallas_call(
        kb_bias_kernel,
        out_shape=jax.ShapeDtypeStruct((b_pad, num_rels), out_dtype),
        grid=(b_pad // tile,),
        in_specs=[pl.BlockSpec((tile, 1), lambda i: (i, 0))],
        # Last block dim == full array dim (num_rels): no column padding needed.
        out_specs=pl.BlockSpec((tile, num_rels), lambda i: (i, 0)),
        compiler_params=pltpu.CompilerParams(
            dimension_semantics=("parallel",),
        ),
    )(keys_pad)

    return out_padded if b_pad == B else out_padded[:B]


def _reference(labels, kb_flat, num_obj, num_rels):
    labels = jnp.clip(labels.astype(jnp.int32), 0, num_obj - 1)
    keys = kb_flat[labels[:, 0] * num_obj + labels[:, 1]]
    return jax.nn.one_hot(keys, num_rels, dtype=jnp.float32)


if __name__ == "__main__":
    key = jax.random.PRNGKey(0)
    k_lab, k_kb, k_mask, k_lab2, k_lab3 = jax.random.split(key, 5)

    NUM_OBJ = 16     # synthetic number of object classes
    NUM_RELS = 51    # cfg.MODEL.ROI_RELATION_HEAD.NUM_CLASSES (VG convention)

    # Synthetic deterministic KB: one relation per (h, t) pair; 0 == "not in KB".
    kb_vals = jax.random.randint(k_kb, (NUM_OBJ * NUM_OBJ,), 1, NUM_RELS, dtype=jnp.int32)
    in_kb = jax.random.bernoulli(k_mask, 0.5, (NUM_OBJ * NUM_OBJ,))
    kb_flat = jnp.where(in_kb, kb_vals, 0).astype(jnp.int32)

    # 1) Small batch (matches original test shape) — exercises the fast path...
    B = 8
    labels = jax.random.randint(k_lab, (B, 2), 0, NUM_OBJ, dtype=jnp.int32)
    ref = _reference(labels, kb_flat, NUM_OBJ, NUM_RELS)
    out_fast = jax.block_until_ready(kb_bias_forward(labels, kb_flat, NUM_OBJ, NUM_RELS))
    assert out_fast.shape == (B, NUM_RELS) and out_fast.dtype == jnp.float32
    assert jnp.allclose(out_fast, ref), "mismatch vs reference (fast path, B=8)"
    # ...and the Pallas kernel forced on the same tiny batch.
    out_k = jax.block_until_ready(
        kb_bias_forward(labels, kb_flat, NUM_OBJ, NUM_RELS, pallas_min_batch=0)
    )
    assert jnp.allclose(out_k, ref), "mismatch vs reference (kernel, B=8)"

    # 2) Non-aligned batch through the kernel (padding + row slice path).
    B2 = 100
    labels2 = jax.random.randint(k_lab2, (B2, 2), 0, NUM_OBJ, dtype=jnp.int32)
    out2 = jax.block_until_ready(
        kb_bias_forward(labels2, kb_flat, NUM_OBJ, NUM_RELS, pallas_min_batch=0)
    )
    ref2 = _reference(labels2, kb_flat, NUM_OBJ, NUM_RELS)
    assert out2.shape == (B2, NUM_RELS)
    assert jnp.allclose(out2, ref2), "mismatch vs reference (kernel, B=100)"

    # 3) Larger batch: default path selects the kernel with a multi-step grid.
    B3 = 2048
    labels3 = jax.random.randint(k_lab3, (B3, 2), 0, NUM_OBJ, dtype=jnp.int32)
    out3 = jax.block_until_ready(kb_bias_forward(labels3, kb_flat, NUM_OBJ, NUM_RELS))
    ref3 = _reference(labels3, kb_flat, NUM_OBJ, NUM_RELS)
    assert out3.shape == (B3, NUM_RELS)
    assert jnp.allclose(out3, ref3), "mismatch vs reference (kernel, B=2048)"

    print("KERNEL_OK")
</pallas_src>

<mosaic_0001>
module attributes {stable_mosaic.version = 11 : i64} {
  func.func @kb_bias_kernel(%arg0: i32, %arg1: memref<8x1xi32, #tpu.memory_space<vmem>>, %arg2: memref<8x51xf32, #tpu.memory_space<vmem>>) attributes {dimension_semantics = [#tpu.dimension_semantics<parallel>], iteration_bounds = array<i64: 1>, scalar_prefetch = 0 : i64, scratch_operands = 0 : i64, tpu.core_type = #tpu.core_type<tc>, window_params = [{transform_indices = @transform_0, window_bounds = array<i64: 8, 1>}, {transform_indices = @transform_1, window_bounds = array<i64: 8, 51>}]} {
    %0 = tpu.iota {dimensions = array<i32: 1>} : vector<8x51xi32>
    %c0 = arith.constant 0 : index
    %c0_0 = arith.constant 0 : index
    %1 = vector.load %arg1[%c0, %c0_0] : memref<8x1xi32, #tpu.memory_space<vmem>>, vector<8x1xi32>
    %2 = vector.broadcast %1 : vector<8x1xi32> to vector<8x51xi32>
    %3 = arith.cmpi eq, %0, %2 : vector<8x51xi32>
    %4 = arith.extui %3 : vector<8x51xi1> to vector<8x51xi32>
    %5 = arith.sitofp %4 : vector<8x51xi32> to vector<8x51xf32>
    %c0_1 = arith.constant 0 : index
    %c0_2 = arith.constant 0 : index
    %6 = vector.load %arg2[%c0_1, %c0_2] : memref<8x51xf32, #tpu.memory_space<vmem>>, vector<8x51xf32>
    tpu.vector_store %arg2[%c0_1, %c0_2], %5 {strides = array<i32>} : memref<8x51xf32, #tpu.memory_space<vmem>>, vector<8x51xf32>,
    return
  }
  func.func @transform_0(%arg0: i32) -> (i32, i32) {
    %c0_i32 = arith.constant 0 : i32
    %c0_i32_0 = arith.constant 0 : i32
    return %arg0, %c0_i32 : i32, i32
  }
  func.func @transform_1(%arg0: i32) -> (i32, i32) {
    %c0_i32 = arith.constant 0 : i32
    %c0_i32_0 = arith.constant 0 : i32
    return %arg0, %c0_i32 : i32, i32
  }
}

</mosaic_0001>

<llo_original>
// kernel: tpu_custom_call.1
$region0: #{tpu_custom_call.1}
  #allocation0 [shape = 'u32[]', space=smem, size = 0x4, offset = 0x4, fixed_abs, tag = 'smem constant byte address 0x4 - core index']
  #allocation1 [shape = 'u32[144,128]{1,0:T(1,128)}', space=vmem, size = 0x12000, scoped, tag = 'internal scratch']
  %s0 = inlined_call_operand.vmem [shape: s32[8,1], index: 0, kind: input, shape index: {}]
  %s1 = inlined_call_operand.hbm [shape: f32[8,51], index: 1, kind: output, shape index: {}]
  %s2 = sld [smem:[#allocation0]]
  $region14: #{tpu_custom_call.1} parent=0
    _
  %s4 = ssub.s32 1, %s2
  %s5 = scalar_select 0, %s4, %s2
  $region1: #{tpu_custom_call.1} parent=0
    #allocation2 [shape = 'u8[4096]{0}', space=vmem, size = 0x1000, scoped, tag = 'output window, operand 0, single buffered']
    #allocation3 [shape = 's32[1]{0}', space=sflag, size = 0x4, scoped, tag = 'scoped memory for tpu_custom_call.1']
    %6 = vsyncpa [#allocation3], 0
    // Predicated region
    $region2: #{tpu_custom_call.1} parent=1 // pred_check
      _
    $region3: #{tpu_custom_call.1} parent=1 // pred_check_branch
      %8 = sbr.rel (0) target = $region5
    $region4: #{tpu_custom_call.1} parent=1 // pred_region
      _
    $region5: #{tpu_custom_call.1} parent=1 // pred_fallthru
      _
    %v9 = vlaneseq
    %v10 = vand.u32 %v9, 127
    %v11 = vld [vmem:[%s0] sm:$0xff]
    %12 = vset.pattern.permute.xlu0 0
    %13 = vperm.xlu0 %12, %v11
    %v14 = vpop.permute.xlu0 %13
    %vm15 = vcmp.eq.s32.totalorder %v10, %v14
    %v16 = vsel %vm15, 1, 0
    %v17 = vcvt.s32.f32 %v16
    %vm18 = vcmask 416768
    %19 = vst.msk [vmem:[#allocation2] sm:$0xff] %vm18, %v17
    // Predicated region
    $region6: #{tpu_custom_call.1} parent=1 // pred_check
      _
    $region7: #{tpu_custom_call.1} parent=1 // pred_check_branch
      %21 = sbr.rel (0) target = $region9
    $region8: #{tpu_custom_call.1} parent=1 // pred_region
      %s23 = ssub.s32 128, 128
      %24 = vsyncadd [#allocation3], %s23
      %s26 = sshll.u32 [#allocation2], 4
      %s27 = int_to_ptr.vmem [resolvable:$true] %s26
      %29 = dma.vmem_to_hbm [thread:$0]  %s27, 128, %s1, [#allocation3]
    $region9: #{tpu_custom_call.1} parent=1 // pred_fallthru
      _
    // Predicated region
    $region10: #{tpu_custom_call.1} parent=1 // pred_check
      _
    $region11: #{tpu_custom_call.1} parent=1 // pred_check_branch
      %31 = sbr.rel (0) target = $region13
    $region12: #{tpu_custom_call.1} parent=1 // pred_region
      %32 = dma.done [#allocation3], 128
    $region13: #{tpu_custom_call.1} parent=1 // pred_fallthru
      _
    %33 = vsyncpa [#allocation3], 1

</llo_original>
